<compile_context>
chip_gen: v5e
topology: v5e:2x2
jax: 0.10.0
libtpu: 0.0.40
codegen_flags: <defaults>
</compile_context>

<pallas_src>
import math
from functools import partial

import numpy as np
import jax
import jax.numpy as jnp
from jax.experimental import pallas as pl
from jax.experimental.pallas import tpu as pltpu


def _round_up(x, m):
    return (x + m - 1) // m * m


# ---------------------------------------------------------------------------
# Kernel:  out = emb + two_hot @ table
#   two_hot[r, k] = (k == dp_idx[r]) | (k == ap_idx[r])      (exact 0/1 rows)
#   table rows [0, W)     = [ dpe_window | 0   ]
#   table rows [W, W + L) = [ 0          | ape ]
# so one MXU matmul yields concat(dpe[dp_index[r]], ape[pos[r]]) per row.
# ---------------------------------------------------------------------------
def _dpe_kernel(dp_ref, ap_ref, emb_ref, tab_ref, out_ref, *, kt):
    tr = dp_ref.shape[0]
    kp, d = tab_ref.shape
    dp = dp_ref[...]                       # (TR, 1) int32 local dpe-window row
    ap = ap_ref[...]                       # (TR, 1) int32  W + position-in-seq

    def pe_chunk(base):
        lanes = base + jax.lax.broadcasted_iota(jnp.int32, (tr, kt), 1)
        hot = ((lanes == dp) | (lanes == ap)).astype(tab_ref.dtype)
        # one-hot coefficients are exact in any dtype; HIGHEST keeps the f32
        # table values exact through the MXU (result == plain row gather).
        return jnp.dot(hot, tab_ref[pl.ds(base, kt), :],
                       preferred_element_type=jnp.float32,
                       precision=jax.lax.Precision.HIGHEST)

    if kp == kt:                           # common case: whole table, one matmul
        pe = pe_chunk(0)
    else:                                  # K-tiled accumulation over the table
        def body(c, acc):
            return acc + pe_chunk(pl.multiple_of(c * kt, kt))
        pe = jax.lax.fori_loop(0, kp // kt, body,
                               jnp.zeros((tr, d), jnp.float32),
                               unroll=(kp // kt) <= 4)

    out_ref[...] = (emb_ref[...].astype(jnp.float32) + pe).astype(out_ref.dtype)


@partial(jax.jit, static_argnames=("tr", "kt"))
def _dpe_add(dp_idx, ap_idx, emb_flat, table, *, tr, kt):
    rows, d = emb_flat.shape
    kp = table.shape[0]
    n_blocks = rows // tr

    # Rough scoped-VMEM budget: double-buffered emb/out blocks + resident
    # single-buffered table + index columns + in-kernel temporaries.
    est = (2 * 2 * tr * d * emb_flat.dtype.itemsize
           + kp * d * table.dtype.itemsize
           + 2 * 2 * tr * 4
           + tr * kt * 4 + tr * d * 4 + (2 << 20))
    vmem_limit = int(min(max(est, 32 << 20), 64 << 20))

    grid_spec = pltpu.PrefetchScalarGridSpec(
        num_scalar_prefetch=0,
        grid=(n_blocks,),
        in_specs=[
            pl.BlockSpec((tr, 1), lambda i: (i, 0)),           # dpe-window index
            pl.BlockSpec((tr, 1), lambda i: (i, 0)),           # ape index
            pl.BlockSpec((tr, d), lambda i: (i, 0)),           # emb rows
            pl.BlockSpec((kp, d), lambda i: (0, 0),
                         pipeline_mode=pl.Buffered(1)),        # resident table
        ],
        out_specs=pl.BlockSpec((tr, d), lambda i: (i, 0)),
    )
    return pl.pallas_call(
        partial(_dpe_kernel, kt=kt),
        out_shape=jax.ShapeDtypeStruct((rows, d), emb_flat.dtype),
        grid_spec=grid_spec,
        compiler_params=pltpu.CompilerParams(
            dimension_semantics=("parallel",),
            vmem_limit_bytes=vmem_limit),
    )(dp_idx, ap_idx, emb_flat, table)


# ---------------------------------------------------------------------------
# Module wrapper (tables built once, like register_buffer).
# ---------------------------------------------------------------------------
class DistancePositionalEncodingPallas:
    """JAX/Pallas port of the PyTorch DistancePositionalEncoding forward."""

    KT_MAX = 512      # lane chunk of the two-hot matmul contraction dim
    ROW_TILE = 512    # target rows per grid block (>=512 rows when available)

    def __init__(self, dim, max_len=5000):
        assert dim % 4 == 0, "dim//2 must be even (same as the PyTorch code)"
        mid_pos = max_len // 2
        half = dim // 2
        ap = np.arange(0, max_len, dtype=np.float32)[:, None]
        dp = np.abs(np.arange(0, max_len)[:, None] - mid_pos).astype(np.float32)
        div_term = np.exp(np.arange(0, half, 2, dtype=np.float32)
                          * -(math.log(10000.0) / dim * 2))
        ape = np.zeros((max_len, half), np.float32)
        dpe = np.zeros((max_len, half), np.float32)
        ape[:, 0::2] = np.sin(ap * div_term)
        ape[:, 1::2] = np.cos(ap * div_term)
        dpe[:, 0::2] = np.sin(dp * div_term)
        dpe[:, 1::2] = np.cos(dp * div_term)

        self._ape_np = ape            # (max_len, dim//2) host copies
        self._dpe_np = dpe
        self.dim = dim
        self.max_len = max_len
        self.mid_pos = mid_pos
        self._table_cache = {}        # (L, w_lo, w_hi, dtype) -> device table

    # -- host-side ragged bookkeeping (torch.split over a Python list) -------
    def _dp_index_np(self, shift, length):
        pos = np.arange(length, dtype=np.int64)
        rows = np.zeros((len(shift), length), np.int64)
        for i, ex in enumerate(shift):
            ex = np.asarray(ex).astype(np.int64).reshape(-1)
            m = np.concatenate([np.zeros(1, np.int64),
                                (ex[1:] + ex[:-1]) // 2 + 1,
                                np.full(1, length, np.int64)])
            for j in range(ex.shape[0]):          # later segments win, as in torch
                rows[i, m[j]:m[j + 1]] = self.mid_pos + pos[m[j]:m[j + 1]] - ex[j]
        return rows

    def _pe_table(self, length, dp, dtype):
        # Window of dpe rows dp_index can touch (normally [mid-L, mid+L) = 2L rows),
        # extended if an unusual shift pushes indices outside the static window.
        w_lo = max(0, min(self.mid_pos - length, int(dp.min())))
        w_hi = min(self.max_len, max(self.mid_pos + length, int(dp.max()) + 1))
        key = (length, w_lo, w_hi, np.dtype(dtype).name)
        if key not in self._table_cache:
            W = w_hi - w_lo
            n = W + length
            kt = _round_up(n, 8) if n <= self.KT_MAX else self.KT_MAX
            kp = _round_up(n, kt)
            half = self.dim // 2
            tab = np.zeros((kp, self.dim), np.float32)
            tab[:W, :half] = self._dpe_np[w_lo:w_hi]          # [dpe_window | 0 ]
            tab[W:W + length, half:] = self._ape_np[:length]  # [0 | ape[:L]    ]
            self._table_cache[key] = (jnp.asarray(tab, dtype=dtype), w_lo, W, kt)
        return self._table_cache[key]

    def __call__(self, emb, shift):
        B, L, D = emb.shape
        assert D == self.dim and L <= self.max_len

        # 1) ragged segment bookkeeping once on the host (tiny; avoids an XLA
        #    micro-op storm before the kernel).
        dp = self._dp_index_np(shift, L)
        dp = dp % self.max_len   # same wrap torch fancy-indexing allows; guards VMEM OOB

        # 2) windowed, fused [dpe | ape] table, resident in VMEM (bf16 when emb is bf16).
        tab_dtype = jnp.bfloat16 if emb.dtype == jnp.bfloat16 else jnp.float32
        table, w_lo, W, kt = self._pe_table(L, dp, tab_dtype)

        # 3) flatten rows and pick a large row tile (lane-dense (TR, D) blocks).
        BL = B * L
        row_bytes = D * np.dtype(emb.dtype).itemsize
        tr_cap = max(8, ((4 << 20) // row_bytes) // 8 * 8)    # keep blocks <= ~4 MiB
        tr = int(min(self.ROW_TILE, tr_cap, _round_up(BL, 8)))
        rows = _round_up(BL, tr)

        dp_flat = np.zeros((rows,), np.int32)
        ap_flat = np.full((rows,), W, np.int32)               # pad rows -> valid index
        dp_flat[:BL] = (dp.reshape(-1) - w_lo).astype(np.int32)
        ap_flat[:BL] = W + np.tile(np.arange(L, dtype=np.int32), B)

        emb_flat = emb.reshape(BL, D)
        if rows != BL:
            emb_flat = jnp.pad(emb_flat, ((0, rows - BL), (0, 0)))

        out = _dpe_add(jnp.asarray(dp_flat[:, None]),
                       jnp.asarray(ap_flat[:, None]),
                       emb_flat, table, tr=tr, kt=kt)
        return out[:BL].reshape(B, L, D)


if __name__ == "__main__":
    dim = 256        # dim//2 = 128 -> fully lane-dense PE halves
    max_len = 128
    batch = 2
    length = 16

    key = jax.random.PRNGKey(0)
    emb = jax.random.normal(key, (batch, length, dim), jnp.float32)

    # Ragged per-example shift anchors (list of 1-D int tensors, as in PyTorch).
    shift = [jnp.array([2, 9], dtype=jnp.int32),
             jnp.array([1, 6, 12], dtype=jnp.int32)]

    module = DistancePositionalEncodingPallas(dim, max_len=max_len)
    out = jax.block_until_ready(module(emb, shift))

    # Pure-NumPy reference (independent of the windowing/rebasing done above).
    dp_ref = module._dp_index_np(shift, length) % max_len
    pe_ref = np.concatenate(
        [module._dpe_np[dp_ref],
         np.broadcast_to(module._ape_np[:length], (batch, length, dim // 2))],
        axis=-1)
    ref = np.asarray(emb) + pe_ref

    assert out.shape == (batch, length, dim)
    assert np.allclose(np.asarray(out), ref, atol=1e-5, rtol=1e-5), \
        "mismatch vs reference"
    print("KERNEL_OK")
</pallas_src>

<mosaic_0001>
module attributes {stable_mosaic.version = 11 : i64} {
  func.func @_dpe_kernel(%arg0: i32, %arg1: memref<32x1xi32, #tpu.memory_space<vmem>>, %arg2: memref<32x1xi32, #tpu.memory_space<vmem>>, %arg3: memref<32x256xf32, #tpu.memory_space<vmem>>, %arg4: memref<48x256xf32, #tpu.memory_space<vmem>>, %arg5: memref<32x256xf32, #tpu.memory_space<vmem>>) attributes {dimension_semantics = [#tpu.dimension_semantics<parallel>], iteration_bounds = array<i64: 1>, scalar_prefetch = 0 : i64, scratch_operands = 0 : i64, tpu.core_type = #tpu.core_type<tc>, window_params = [{transform_indices = @transform_0, window_bounds = array<i64: 32, 1>}, {transform_indices = @transform_1, window_bounds = array<i64: 32, 1>}, {transform_indices = @transform_2, window_bounds = array<i64: 32, 256>}, {pipeline_mode = #tpu.pipeline_mode<synchronous>, transform_indices = @transform_3, window_bounds = array<i64: 48, 256>}, {transform_indices = @transform_4, window_bounds = array<i64: 32, 256>}]} {
    %c0 = arith.constant 0 : index
    %c0_0 = arith.constant 0 : index
    %0 = vector.load %arg1[%c0, %c0_0] : memref<32x1xi32, #tpu.memory_space<vmem>>, vector<32x1xi32>
    %c0_1 = arith.constant 0 : index
    %c0_2 = arith.constant 0 : index
    %1 = vector.load %arg2[%c0_1, %c0_2] : memref<32x1xi32, #tpu.memory_space<vmem>>, vector<32x1xi32>
    %2 = tpu.iota {dimensions = array<i32: 1>} : vector<32x48xi32>
    %c0_i32 = arith.constant 0 : i32
    %3 = vector.broadcast %c0_i32 : i32 to vector<32x48xi32>
    %4 = arith.addi %3, %2 : vector<32x48xi32>
    %5 = vector.broadcast %0 : vector<32x1xi32> to vector<32x48xi32>
    %6 = arith.cmpi eq, %4, %5 : vector<32x48xi32>
    %7 = vector.broadcast %1 : vector<32x1xi32> to vector<32x48xi32>
    %8 = arith.cmpi eq, %4, %7 : vector<32x48xi32>
    %9 = arith.ori %6, %8 : vector<32x48xi1>
    %10 = arith.extui %9 : vector<32x48xi1> to vector<32x48xi32>
    %11 = arith.sitofp %10 : vector<32x48xi32> to vector<32x48xf32>
    %c0_3 = arith.constant 0 : index
    %c0_4 = arith.constant 0 : index
    %12 = vector.load %arg4[%c0_3, %c0_4] : memref<48x256xf32, #tpu.memory_space<vmem>>, vector<48x256xf32>
    %cst = arith.constant dense<0.000000e+00> : vector<32x256xf32>
    %13 = tpu.matmul %11, %12, %cst {dimension_numbers = #tpu.dot_dimension_numbers<[1], [0], [0], [1], [0, 0, 1, 1], [], []>, precision = #tpu.contract_precision<fp32>} : vector<32x48xf32>, vector<48x256xf32>, vector<32x256xf32> -> vector<32x256xf32>
    %c0_5 = arith.constant 0 : index
    %c0_6 = arith.constant 0 : index
    %14 = vector.load %arg3[%c0_5, %c0_6] : memref<32x256xf32, #tpu.memory_space<vmem>>, vector<32x256xf32>
    %15 = arith.addf %14, %13 : vector<32x256xf32>
    %c0_7 = arith.constant 0 : index
    %c0_8 = arith.constant 0 : index
    %16 = vector.load %arg5[%c0_7, %c0_8] : memref<32x256xf32, #tpu.memory_space<vmem>>, vector<32x256xf32>
    tpu.vector_store %arg5[%c0_7, %c0_8], %15 {strides = array<i32>} : memref<32x256xf32, #tpu.memory_space<vmem>>, vector<32x256xf32>,
    return
  }
  func.func @transform_0(%arg0: i32) -> (i32, i32) {
    %c0_i32 = arith.constant 0 : i32
    %c0_i32_0 = arith.constant 0 : i32
    return %arg0, %c0_i32 : i32, i32
  }
  func.func @transform_1(%arg0: i32) -> (i32, i32) {
    %c0_i32 = arith.constant 0 : i32
    %c0_i32_0 = arith.constant 0 : i32
    return %arg0, %c0_i32 : i32, i32
  }
  func.func @transform_2(%arg0: i32) -> (i32, i32) {
    %c0_i32 = arith.constant 0 : i32
    %c0_i32_0 = arith.constant 0 : i32
    return %arg0, %c0_i32 : i32, i32
  }
  func.func @transform_3(%arg0: i32) -> (i32, i32) {
    %c0_i32 = arith.constant 0 : i32
    %c0_i32_0 = arith.constant 0 : i32
    %c0_i32_1 = arith.constant 0 : i32
    return %c0_i32, %c0_i32_0 : i32, i32
  }
  func.func @transform_4(%arg0: i32) -> (i32, i32) {
    %c0_i32 = arith.constant 0 : i32
    %c0_i32_0 = arith.constant 0 : i32
    return %arg0, %c0_i32 : i32, i32
  }
}

</mosaic_0001>

<llo_original>
// kernel: _dpe_add.1
$region0: #{_dpe_add.1}
  #allocation0 [shape = 'u32[]', space=smem, size = 0x4, offset = 0x4, fixed_abs, tag = 'smem constant byte address 0x4 - core index']
  #allocation1 [shape = 'u32[72,128]{1,0:T(1,128)}', space=vmem, size = 0x9000, scoped, tag = 'internal scratch']
  %s0 = inlined_call_operand.vmem [shape: s32[32,1], index: 0, kind: input, shape index: {}]
  %s1 = inlined_call_operand.vmem [shape: s32[32,1], index: 1, kind: input, shape index: {}]
  %s2 = inlined_call_operand.vmem [shape: f32[32,256], index: 2, kind: input, shape index: {}]
  %s3 = inlined_call_operand.hbm [shape: f32[48,256], index: 3, kind: input, shape index: {}]
  %s4 = inlined_call_operand.hbm [shape: f32[32,256], index: 4, kind: output, shape index: {}]
  %s5 = sld [smem:[#allocation0]]
  $region30: #{_dpe_add.1} parent=0
    _
  %s7 = ssub.s32 1, %s5
  %s8 = scalar_select 0, %s7, %s5
  $region1: #{_dpe_add.1} parent=0
    #allocation2 [shape = 'u8[49152]{0}', space=vmem, size = 0xc000, scoped, tag = 'input window, operand 3, single buffered']
    #allocation3 [shape = 's32[1]{0}', space=sflag, size = 0x4, scoped, tag = 'scoped memory for _dpe_add.1']
    #allocation4 [shape = 's32[1]{0}', space=sflag, size = 0x4, scoped, tag = 'scoped memory for _dpe_add.1']
    #allocation5 [shape = 'u8[32768]{0}', space=vmem, size = 0x8000, scoped, tag = 'output window, operand 0, single buffered']
    %9 = vsyncpa [#allocation3], 0
    %10 = vsyncpa [#allocation4], 0
    // Predicated region
    $region2: #{_dpe_add.1} parent=1 // pred_check
      _
    $region3: #{_dpe_add.1} parent=1 // pred_check_branch
      %12 = sbr.rel (0) target = $region5
    $region4: #{_dpe_add.1} parent=1 // pred_region
      _
    $region5: #{_dpe_add.1} parent=1 // pred_fallthru
      _
    // Predicated region
    $region6: #{_dpe_add.1} parent=1 // pred_check
      _
    $region7: #{_dpe_add.1} parent=1 // pred_check_branch
      %14 = sbr.rel (0) target = $region9
    $region8: #{_dpe_add.1} parent=1 // pred_region
      _
    $region9: #{_dpe_add.1} parent=1 // pred_fallthru
      _
    // Predicated region
    $region10: #{_dpe_add.1} parent=1 // pred_check
      _
    $region11: #{_dpe_add.1} parent=1 // pred_check_branch
      %16 = sbr.rel (0) target = $region13
    $region12: #{_dpe_add.1} parent=1 // pred_region
      _
    $region13: #{_dpe_add.1} parent=1 // pred_fallthru
      _
    // Predicated region
    $region14: #{_dpe_add.1} parent=1 // pred_check
      _
    $region15: #{_dpe_add.1} parent=1 // pred_check_branch
      %18 = sbr.rel (0) target = $region17
    $region16: #{_dpe_add.1} parent=1 // pred_region
      %20 = vsyncadd [#allocation3], 0
      %s21 = sshll.u32 %s3, 4
      %s22 = int_to_ptr.hbm [resolvable:$true] %s21
      %s23 = sshll.u32 [#allocation2], 4
      %s24 = int_to_ptr.vmem [resolvable:$true] %s23
      %29 = dma.hbm_to_vmem [thread:$0]  %s22, 1536, %s24, [#allocation3], 256, 256, 16
    $region17: #{_dpe_add.1} parent=1 // pred_fallthru
      _
    // Predicated region
    $region18: #{_dpe_add.1} parent=1 // pred_check
      _
    $region19: #{_dpe_add.1} parent=1 // pred_check_branch
      %31 = sbr.rel (0) target = $region21
    $region20: #{_dpe_add.1} parent=1 // pred_region
      %33 = dma.done [#allocation3], 1536
    $region21: #{_dpe_add.1} parent=1 // pred_fallthru
      _
    %v34 = vld [vmem:[%s0] sm:$0xff]
    %v35 = vld [vmem:[%s0 + $0x8] sm:$0xff]
    %v36 = vld [vmem:[%s0 + $0x10] sm:$0xff]
    %v37 = vld [vmem:[%s0 + $0x18] sm:$0xff]
    %v38 = vld [vmem:[%s1] sm:$0xff]
    %v39 = vld [vmem:[%s1 + $0x8] sm:$0xff]
    %v40 = vld [vmem:[%s1 + $0x10] sm:$0xff]
    %v41 = vld [vmem:[%s1 + $0x18] sm:$0xff]
    %v42 = vlaneseq
    %v43 = vand.u32 %v42, 127
    %44 = vset.pattern.permute.xlu0 0
    %45 = vperm.xlu0 %44, %v34
    %v46 = vpop.permute.xlu0 %45
    %47 = vset.pattern.permute.xlu0 0
    %48 = vperm.xlu0 %47, %v35
    %v49 = vpop.permute.xlu0 %48
    %50 = vset.pattern.permute.xlu0 0
    %51 = vperm.xlu0 %50, %v36
    %v52 = vpop.permute.xlu0 %51
    %53 = vset.pattern.permute.xlu0 0
    %54 = vperm.xlu0 %53, %v37
    %v55 = vpop.permute.xlu0 %54
    %vm56 = vcmp.eq.s32.totalorder %v43, %v46
    %vm57 = vcmp.eq.s32.totalorder %v43, %v49
    %vm58 = vcmp.eq.s32.totalorder %v43, %v52
    %vm59 = vcmp.eq.s32.totalorder %v43, %v55
    %60 = vset.pattern.permute.xlu0 0
    %61 = vperm.xlu0 %60, %v38
    %v62 = vpop.permute.xlu0 %61
    %63 = vset.pattern.permute.xlu0 0
    %64 = vperm.xlu0 %63, %v39
    %v65 = vpop.permute.xlu0 %64
    %66 = vset.pattern.permute.xlu0 0
    %67 = vperm.xlu0 %66, %v40
    %v68 = vpop.permute.xlu0 %67
    %69 = vset.pattern.permute.xlu0 0
    %70 = vperm.xlu0 %69, %v41
    %v71 = vpop.permute.xlu0 %70
    %vm72 = vcmp.eq.s32.totalorder %v43, %v62
    %vm73 = vcmp.eq.s32.totalorder %v43, %v65
    %vm74 = vcmp.eq.s32.totalorder %v43, %v68
    %vm75 = vcmp.eq.s32.totalorder %v43, %v71
    %vm76 = vmor %vm56, %vm72
    %vm77 = vmor %vm57, %vm73
    %vm78 = vmor %vm58, %vm74
    %vm79 = vmor %vm59, %vm75
    %v80 = vsel %vm76, 1, 0
    %v81 = vsel %vm77, 1, 0
    %v82 = vsel %vm78, 1, 0
    %v83 = vsel %vm79, 1, 0
    %v84 = vcvt.s32.f32 %v80
    %v85 = vcvt.s32.f32 %v81
    %v86 = vcvt.s32.f32 %v82
    %v87 = vcvt.s32.f32 %v83
    %v88 = vld [vmem:[#allocation2] sm:$0xff]
    %v89 = vld [vmem:[#allocation2 + $0x8] sm:$0xff]
    %v90 = vld [vmem:[#allocation2 + $0x10] sm:$0xff]
    %v91 = vld [vmem:[#allocation2 + $0x18] sm:$0xff]
    %v92 = vld [vmem:[#allocation2 + $0x20] sm:$0xff]
    %v93 = vld [vmem:[#allocation2 + $0x28] sm:$0xff]
    %v94 = vld [vmem:[#allocation2 + $0x30] sm:$0xff]
    %v95 = vld [vmem:[#allocation2 + $0x38] sm:$0xff]
    %v96 = vld [vmem:[#allocation2 + $0x40] sm:$0xff]
    %v97 = vld [vmem:[#allocation2 + $0x48] sm:$0xff]
    %v98 = vld [vmem:[#allocation2 + $0x50] sm:$0xff]
    %v99 = vld [vmem:[#allocation2 + $0x58] sm:$0xff]
    %vm100 = vcmask 392192
    %v102 = vsel %vm100, %v84, 0
    %v105 = vsel %vm100, %v85, 0
    %v108 = vsel %vm100, %v86, 0
    %v111 = vsel %vm100, %v87, 0
    %113 = vmatpush.msra.mxu0 0.0
    %114 = vmatpush.msra.mxu0 0.0
    %115 = vmatpush.msra.mxu0 0.0
    %116 = vmatpush.msra.mxu0 0.0
    %117 = vmatpush.msra.mxu0 0.0
    %118 = vmatpush.msra.mxu0 0.0
    %119 = vmatpush.msra.mxu0 0.0
    %120 = vmatpush.msra.mxu0 0.0
    %121 = vmatpush.msra.mxu0 0.0
    %122 = vmatpush.msra.mxu0 0.0
    %v123 = vand.u32 %v98, 4294901760
    %124 = vmatpush.msra.mxu0 %v123
    %v125 = vand.u32 %v96, 4294901760
    %126 = vmatpush.msra.mxu0 %v125
    %v127 = vand.u32 %v94, 4294901760
    %128 = vmatpush.msra.mxu0 %v127
    %v129 = vand.u32 %v92, 4294901760
    %130 = vmatpush.msra.mxu0 %v129
    %v131 = vand.u32 %v90, 4294901760
    %132 = vmatpush.msra.mxu0 %v131
    %v133 = vand.u32 %v88, 4294901760
    %134 = vmatpush.msra.mxu0 %v133
    %v135 = vand.u32 %v102, 4294901760
    %v136 = vsub.f32 %v102, %v135
    %v137 = vand.u32 %v136, 4294901760
    %v138 = vsub.f32 %v136, %v137
    %v139 = vand.u32 %v138, 4294901760
    %140 = vmatmul.f32.gmra.mxu0 %v139
    %v141 = vpop.f32.mrf.mxu0
    %v142 = vadd.f32 0.0, %v141
    %v143 = vand.u32 %v105, 4294901760
    %v144 = vsub.f32 %v105, %v143
    %v145 = vand.u32 %v144, 4294901760
    %v146 = vsub.f32 %v144, %v145
    %v147 = vand.u32 %v146, 4294901760
    %148 = vmatmul.f32.gmra.mxu0 %v147
    %v149 = vpop.f32.mrf.mxu0
    %v150 = vadd.f32 0.0, %v149
    %v151 = vand.u32 %v108, 4294901760
    %v152 = vsub.f32 %v108, %v151
    %v153 = vand.u32 %v152, 4294901760
    %v154 = vsub.f32 %v152, %v153
    %v155 = vand.u32 %v154, 4294901760
    %156 = vmatmul.f32.gmra.mxu0 %v155
    %v157 = vpop.f32.mrf.mxu0
    %v158 = vadd.f32 0.0, %v157
    %v159 = vand.u32 %v111, 4294901760
    %v160 = vsub.f32 %v111, %v159
    %v161 = vand.u32 %v160, 4294901760
    %v162 = vsub.f32 %v160, %v161
    %v163 = vand.u32 %v162, 4294901760
    %164 = vmatmul.f32.gmra.mxu0 %v163
    %v165 = vpop.f32.mrf.mxu0
    %v166 = vadd.f32 0.0, %v165
    %167 = vdwg.mxu0
    %168 = vmatpush.msra.mxu0 0.0
    %169 = vmatpush.msra.mxu0 0.0
    %170 = vmatpush.msra.mxu0 0.0
    %171 = vmatpush.msra.mxu0 0.0
    %172 = vmatpush.msra.mxu0 0.0
    %173 = vmatpush.msra.mxu0 0.0
    %174 = vmatpush.msra.mxu0 0.0
    %175 = vmatpush.msra.mxu0 0.0
    %176 = vmatpush.msra.mxu0 0.0
    %177 = vmatpush.msra.mxu0 0.0
    %v178 = vand.u32 %v98, 4294901760
    %v179 = vsub.f32 %v98, %v178
    %v180 = vand.u32 %v179, 4294901760
    %v181 = vsub.f32 %v179, %v180
    %v182 = vand.u32 %v181, 4294901760
    %183 = vmatpush.msra.mxu0 %v182
    %v184 = vand.u32 %v96, 4294901760
    %v185 = vsub.f32 %v96, %v184
    %v186 = vand.u32 %v185, 4294901760
    %v187 = vsub.f32 %v185, %v186
    %v188 = vand.u32 %v187, 4294901760
    %189 = vmatpush.msra.mxu0 %v188
    %v190 = vand.u32 %v94, 4294901760
    %v191 = vsub.f32 %v94, %v190
    %v192 = vand.u32 %v191, 4294901760
    %v193 = vsub.f32 %v191, %v192
    %v194 = vand.u32 %v193, 4294901760
    %195 = vmatpush.msra.mxu0 %v194
    %v196 = vand.u32 %v92, 4294901760
    %v197 = vsub.f32 %v92, %v196
    %v198 = vand.u32 %v197, 4294901760
    %v199 = vsub.f32 %v197, %v198
    %v200 = vand.u32 %v199, 4294901760
    %201 = vmatpush.msra.mxu0 %v200
    %v202 = vand.u32 %v90, 4294901760
    %v203 = vsub.f32 %v90, %v202
    %v204 = vand.u32 %v203, 4294901760
    %v205 = vsub.f32 %v203, %v204
    %v206 = vand.u32 %v205, 4294901760
    %207 = vmatpush.msra.mxu0 %v206
    %v208 = vand.u32 %v88, 4294901760
    %v209 = vsub.f32 %v88, %v208
    %v210 = vand.u32 %v209, 4294901760
    %v211 = vsub.f32 %v209, %v210
    %v212 = vand.u32 %v211, 4294901760
    %213 = vmatpush.msra.mxu0 %v212
    %v214 = vand.u32 %v102, 4294901760
    %215 = vmatmul.f32.gmra.mxu0 %v214
    %v216 = vpop.f32.mrf.mxu0
    %v217 = vadd.f32 %v142, %v216
    %v218 = vand.u32 %v105, 4294901760
    %219 = vmatmul.f32.gmra.mxu0 %v218
    %v220 = vpop.f32.mrf.mxu0
    %v221 = vadd.f32 %v150, %v220
    %v222 = vand.u32 %v108, 4294901760
    %223 = vmatmul.f32.gmra.mxu0 %v222
    %v224 = vpop.f32.mrf.mxu0
    %v225 = vadd.f32 %v158, %v224
    %v226 = vand.u32 %v111, 4294901760
    %227 = vmatmul.f32.gmra.mxu0 %v226
    %v228 = vpop.f32.mrf.mxu0
    %v229 = vadd.f32 %v166, %v228
    %230 = vdwg.mxu0
    %231 = vmatpush.msra.mxu0 0.0
    %232 = vmatpush.msra.mxu0 0.0
    %233 = vmatpush.msra.mxu0 0.0
    %234 = vmatpush.msra.mxu0 0.0
    %235 = vmatpush.msra.mxu0 0.0
    %236 = vmatpush.msra.mxu0 0.0
    %237 = vmatpush.msra.mxu0 0.0
    %238 = vmatpush.msra.mxu0 0.0
    %239 = vmatpush.msra.mxu0 0.0
    %240 = vmatpush.msra.mxu0 0.0
    %v241 = vand.u32 %v98, 4294901760
    %v242 = vsub.f32 %v98, %v241
    %243 = vmatpush.msra.mxu0 %v242
    %v244 = vand.u32 %v96, 4294901760
    %v245 = vsub.f32 %v96, %v244
    %246 = vmatpush.msra.mxu0 %v245
    %v247 = vand.u32 %v94, 4294901760
    %v248 = vsub.f32 %v94, %v247
    %249 = vmatpush.msra.mxu0 %v248
    %v250 = vand.u32 %v92, 4294901760
    %v251 = vsub.f32 %v92, %v250
    %252 = vmatpush.msra.mxu0 %v251
    %v253 = vand.u32 %v90, 4294901760
    %v254 = vsub.f32 %v90, %v253
    %255 = vmatpush.msra.mxu0 %v254
    %v256 = vand.u32 %v88, 4294901760
    %v257 = vsub.f32 %v88, %v256
    %258 = vmatpush.msra.mxu0 %v257
    %v259 = vand.u32 %v102, 4294901760
    %v260 = vsub.f32 %v102, %v259
    %261 = vmatmul.f32.gmra.mxu0 %v260
    %v262 = vpop.f32.mrf.mxu0
    %v263 = vadd.f32 %v217, %v262
    %v264 = vand.u32 %v105, 4294901760
    %v265 = vsub.f32 %v105, %v264
    %266 = vmatmul.f32.gmra.mxu0 %v265
    %v267 = vpop.f32.mrf.mxu0
    %v268 = vadd.f32 %v221, %v267
    %v269 = vand.u32 %v108, 4294901760
    %v270 = vsub.f32 %v108, %v269
    %271 = vmatmul.f32.gmra.mxu0 %v270
    %v272 = vpop.f32.mrf.mxu0
    %v273 = vadd.f32 %v225, %v272
    %v274 = vand.u32 %v111, 4294901760
    %v275 = vsub.f32 %v111, %v274
    %276 = vmatmul.f32.gmra.mxu0 %v275
    %v277 = vpop.f32.mrf.mxu0
    %v278 = vadd.f32 %v229, %v277
    %279 = vdwg.mxu0
    %280 = vmatpush.msra.mxu0 0.0
    %281 = vmatpush.msra.mxu0 0.0
    %282 = vmatpush.msra.mxu0 0.0
    %283 = vmatpush.msra.mxu0 0.0
    %284 = vmatpush.msra.mxu0 0.0
    %285 = vmatpush.msra.mxu0 0.0
    %286 = vmatpush.msra.mxu0 0.0
    %287 = vmatpush.msra.mxu0 0.0
    %288 = vmatpush.msra.mxu0 0.0
    %289 = vmatpush.msra.mxu0 0.0
    %v290 = vand.u32 %v98, 4294901760
    %291 = vmatpush.msra.mxu0 %v290
    %v292 = vand.u32 %v96, 4294901760
    %293 = vmatpush.msra.mxu0 %v292
    %v294 = vand.u32 %v94, 4294901760
    %295 = vmatpush.msra.mxu0 %v294
    %v296 = vand.u32 %v92, 4294901760
    %297 = vmatpush.msra.mxu0 %v296
    %v298 = vand.u32 %v90, 4294901760
    %299 = vmatpush.msra.mxu0 %v298
    %v300 = vand.u32 %v88, 4294901760
    %301 = vmatpush.msra.mxu0 %v300
    %v302 = vand.u32 %v102, 4294901760
    %v303 = vsub.f32 %v102, %v302
    %v304 = vand.u32 %v303, 4294901760
    %305 = vmatmul.f32.gmra.mxu0 %v304
    %v306 = vpop.f32.mrf.mxu0
    %v307 = vadd.f32 %v263, %v306
    %v308 = vand.u32 %v105, 4294901760
    %v309 = vsub.f32 %v105, %v308
    %v310 = vand.u32 %v309, 4294901760
    %311 = vmatmul.f32.gmra.mxu0 %v310
    %v312 = vpop.f32.mrf.mxu0
    %v313 = vadd.f32 %v268, %v312
    %v314 = vand.u32 %v108, 4294901760
    %v315 = vsub.f32 %v108, %v314
    %v316 = vand.u32 %v315, 4294901760
    %317 = vmatmul.f32.gmra.mxu0 %v316
    %v318 = vpop.f32.mrf.mxu0
    %v319 = vadd.f32 %v273, %v318
    %v320 = vand.u32 %v111, 4294901760
    %v321 = vsub.f32 %v111, %v320
    %v322 = vand.u32 %v321, 4294901760
    %323 = vmatmul.f32.gmra.mxu0 %v322
    %v324 = vpop.f32.mrf.mxu0
    %v325 = vadd.f32 %v278, %v324
    %326 = vdwg.mxu0
    %327 = vmatpush.msra.mxu0 0.0
    %328 = vmatpush.msra.mxu0 0.0
    %329 = vmatpush.msra.mxu0 0.0
    %330 = vmatpush.msra.mxu0 0.0
    %331 = vmatpush.msra.mxu0 0.0
    %332 = vmatpush.msra.mxu0 0.0
    %333 = vmatpush.msra.mxu0 0.0
    %334 = vmatpush.msra.mxu0 0.0
    %335 = vmatpush.msra.mxu0 0.0
    %336 = vmatpush.msra.mxu0 0.0
    %v337 = vand.u32 %v98, 4294901760
    %v338 = vsub.f32 %v98, %v337
    %v339 = vand.u32 %v338, 4294901760
    %340 = vmatpush.msra.mxu0 %v339
    %v341 = vand.u32 %v96, 4294901760
    %v342 = vsub.f32 %v96, %v341
    %v343 = vand.u32 %v342, 4294901760
    %344 = vmatpush.msra.mxu0 %v343
    %v345 = vand.u32 %v94, 4294901760
    %v346 = vsub.f32 %v94, %v345
    %v347 = vand.u32 %v346, 4294901760
    %348 = vmatpush.msra.mxu0 %v347
    %v349 = vand.u32 %v92, 4294901760
    %v350 = vsub.f32 %v92, %v349
    %v351 = vand.u32 %v350, 4294901760
    %352 = vmatpush.msra.mxu0 %v351
    %v353 = vand.u32 %v90, 4294901760
    %v354 = vsub.f32 %v90, %v353
    %v355 = vand.u32 %v354, 4294901760
    %356 = vmatpush.msra.mxu0 %v355
    %v357 = vand.u32 %v88, 4294901760
    %v358 = vsub.f32 %v88, %v357
    %v359 = vand.u32 %v358, 4294901760
    %360 = vmatpush.msra.mxu0 %v359
    %v361 = vand.u32 %v102, 4294901760
    %362 = vmatmul.f32.gmra.mxu0 %v361
    %v363 = vpop.f32.mrf.mxu0
    %v364 = vadd.f32 %v307, %v363
    %v365 = vand.u32 %v105, 4294901760
    %366 = vmatmul.f32.gmra.mxu0 %v365
    %v367 = vpop.f32.mrf.mxu0
    %v368 = vadd.f32 %v313, %v367
    %v369 = vand.u32 %v108, 4294901760
    %370 = vmatmul.f32.gmra.mxu0 %v369
    %v371 = vpop.f32.mrf.mxu0
    %v372 = vadd.f32 %v319, %v371
    %v373 = vand.u32 %v111, 4294901760
    %374 = vmatmul.f32.gmra.mxu0 %v373
    %v375 = vpop.f32.mrf.mxu0
    %v376 = vadd.f32 %v325, %v375
    %377 = vdwg.mxu0
    %378 = vmatpush.msra.mxu0 0.0
    %379 = vmatpush.msra.mxu0 0.0
    %380 = vmatpush.msra.mxu0 0.0
    %381 = vmatpush.msra.mxu0 0.0
    %382 = vmatpush.msra.mxu0 0.0
    %383 = vmatpush.msra.mxu0 0.0
    %384 = vmatpush.msra.mxu0 0.0
    %385 = vmatpush.msra.mxu0 0.0
    %386 = vmatpush.msra.mxu0 0.0
    %387 = vmatpush.msra.mxu0 0.0
    %v388 = vand.u32 %v98, 4294901760
    %389 = vmatpush.msra.mxu0 %v388
    %v390 = vand.u32 %v96, 4294901760
    %391 = vmatpush.msra.mxu0 %v390
    %v392 = vand.u32 %v94, 4294901760
    %393 = vmatpush.msra.mxu0 %v392
    %v394 = vand.u32 %v92, 4294901760
    %395 = vmatpush.msra.mxu0 %v394
    %v396 = vand.u32 %v90, 4294901760
    %397 = vmatpush.msra.mxu0 %v396
    %v398 = vand.u32 %v88, 4294901760
    %399 = vmatpush.msra.mxu0 %v398
    %v400 = vand.u32 %v102, 4294901760
    %401 = vmatmul.f32.gmra.mxu0 %v400
    %v402 = vpop.f32.mrf.mxu0
    %v403 = vadd.f32 %v364, %v402
    %v404 = vand.u32 %v105, 4294901760
    %405 = vmatmul.f32.gmra.mxu0 %v404
    %v406 = vpop.f32.mrf.mxu0
    %v407 = vadd.f32 %v368, %v406
    %v408 = vand.u32 %v108, 4294901760
    %409 = vmatmul.f32.gmra.mxu0 %v408
    %v410 = vpop.f32.mrf.mxu0
    %v411 = vadd.f32 %v372, %v410
    %v412 = vand.u32 %v111, 4294901760
    %413 = vmatmul.f32.gmra.mxu0 %v412
    %v414 = vpop.f32.mrf.mxu0
    %v415 = vadd.f32 %v376, %v414
    %416 = vdwg.mxu0
    %417 = vmatpush.msra.mxu0 0.0
    %418 = vmatpush.msra.mxu0 0.0
    %419 = vmatpush.msra.mxu0 0.0
    %420 = vmatpush.msra.mxu0 0.0
    %421 = vmatpush.msra.mxu0 0.0
    %422 = vmatpush.msra.mxu0 0.0
    %423 = vmatpush.msra.mxu0 0.0
    %424 = vmatpush.msra.mxu0 0.0
    %425 = vmatpush.msra.mxu0 0.0
    %426 = vmatpush.msra.mxu0 0.0
    %v427 = vand.u32 %v99, 4294901760
    %428 = vmatpush.msra.mxu0 %v427
    %v429 = vand.u32 %v97, 4294901760
    %430 = vmatpush.msra.mxu0 %v429
    %v431 = vand.u32 %v95, 4294901760
    %432 = vmatpush.msra.mxu0 %v431
    %v433 = vand.u32 %v93, 4294901760
    %434 = vmatpush.msra.mxu0 %v433
    %v435 = vand.u32 %v91, 4294901760
    %436 = vmatpush.msra.mxu0 %v435
    %v437 = vand.u32 %v89, 4294901760
    %438 = vmatpush.msra.mxu0 %v437
    %v439 = vand.u32 %v102, 4294901760
    %v440 = vsub.f32 %v102, %v439
    %v441 = vand.u32 %v440, 4294901760
    %v442 = vsub.f32 %v440, %v441
    %v443 = vand.u32 %v442, 4294901760
    %444 = vmatmul.f32.gmra.mxu0 %v443
    %v445 = vpop.f32.mrf.mxu0
    %v446 = vadd.f32 0.0, %v445
    %v447 = vand.u32 %v105, 4294901760
    %v448 = vsub.f32 %v105, %v447
    %v449 = vand.u32 %v448, 4294901760
    %v450 = vsub.f32 %v448, %v449
    %v451 = vand.u32 %v450, 4294901760
    %452 = vmatmul.f32.gmra.mxu0 %v451
    %v453 = vpop.f32.mrf.mxu0
    %v454 = vadd.f32 0.0, %v453
    %v455 = vand.u32 %v108, 4294901760
    %v456 = vsub.f32 %v108, %v455
    %v457 = vand.u32 %v456, 4294901760
    %v458 = vsub.f32 %v456, %v457
    %v459 = vand.u32 %v458, 4294901760
    %460 = vmatmul.f32.gmra.mxu0 %v459
    %v461 = vpop.f32.mrf.mxu0
    %v462 = vadd.f32 0.0, %v461
    %v463 = vand.u32 %v111, 4294901760
    %v464 = vsub.f32 %v111, %v463
    %v465 = vand.u32 %v464, 4294901760
    %v466 = vsub.f32 %v464, %v465
    %v467 = vand.u32 %v466, 4294901760
    %468 = vmatmul.f32.gmra.mxu0 %v467
    %v469 = vpop.f32.mrf.mxu0
    %v470 = vadd.f32 0.0, %v469
    %471 = vdwg.mxu0
    %472 = vmatpush.msra.mxu0 0.0
    %473 = vmatpush.msra.mxu0 0.0
    %474 = vmatpush.msra.mxu0 0.0
    %475 = vmatpush.msra.mxu0 0.0
    %476 = vmatpush.msra.mxu0 0.0
    %477 = vmatpush.msra.mxu0 0.0
    %478 = vmatpush.msra.mxu0 0.0
    %479 = vmatpush.msra.mxu0 0.0
    %480 = vmatpush.msra.mxu0 0.0
    %481 = vmatpush.msra.mxu0 0.0
    %v482 = vand.u32 %v99, 4294901760
    %v483 = vsub.f32 %v99, %v482
    %v484 = vand.u32 %v483, 4294901760
    %v485 = vsub.f32 %v483, %v484
    %v486 = vand.u32 %v485, 4294901760
    %487 = vmatpush.msra.mxu0 %v486
    %v488 = vand.u32 %v97, 4294901760
    %v489 = vsub.f32 %v97, %v488
    %v490 = vand.u32 %v489, 4294901760
    %v491 = vsub.f32 %v489, %v490
    %v492 = vand.u32 %v491, 4294901760
    %493 = vmatpush.msra.mxu0 %v492
    %v494 = vand.u32 %v95, 4294901760
    %v495 = vsub.f32 %v95, %v494
    %v496 = vand.u32 %v495, 4294901760
    %v497 = vsub.f32 %v495, %v496
    %v498 = vand.u32 %v497, 4294901760
    %499 = vmatpush.msra.mxu0 %v498
    %v500 = vand.u32 %v93, 4294901760
    %v501 = vsub.f32 %v93, %v500
    %v502 = vand.u32 %v501, 4294901760
    %v503 = vsub.f32 %v501, %v502
    %v504 = vand.u32 %v503, 4294901760
    %505 = vmatpush.msra.mxu0 %v504
    %v506 = vand.u32 %v91, 4294901760
    %v507 = vsub.f32 %v91, %v506
    %v508 = vand.u32 %v507, 4294901760
    %v509 = vsub.f32 %v507, %v508
    %v510 = vand.u32 %v509, 4294901760
    %511 = vmatpush.msra.mxu0 %v510
    %v512 = vand.u32 %v89, 4294901760
    %v513 = vsub.f32 %v89, %v512
    %v514 = vand.u32 %v513, 4294901760
    %v515 = vsub.f32 %v513, %v514
    %v516 = vand.u32 %v515, 4294901760
    %517 = vmatpush.msra.mxu0 %v516
    %v518 = vand.u32 %v102, 4294901760
    %519 = vmatmul.f32.gmra.mxu0 %v518
    %v520 = vpop.f32.mrf.mxu0
    %v521 = vadd.f32 %v446, %v520
    %v522 = vand.u32 %v105, 4294901760
    %523 = vmatmul.f32.gmra.mxu0 %v522
    %v524 = vpop.f32.mrf.mxu0
    %v525 = vadd.f32 %v454, %v524
    %v526 = vand.u32 %v108, 4294901760
    %527 = vmatmul.f32.gmra.mxu0 %v526
    %v528 = vpop.f32.mrf.mxu0
    %v529 = vadd.f32 %v462, %v528
    %v530 = vand.u32 %v111, 4294901760
    %531 = vmatmul.f32.gmra.mxu0 %v530
    %v532 = vpop.f32.mrf.mxu0
    %v533 = vadd.f32 %v470, %v532
    %534 = vdwg.mxu0
    %535 = vmatpush.msra.mxu0 0.0
    %536 = vmatpush.msra.mxu0 0.0
    %537 = vmatpush.msra.mxu0 0.0
    %538 = vmatpush.msra.mxu0 0.0
    %539 = vmatpush.msra.mxu0 0.0
    %540 = vmatpush.msra.mxu0 0.0
    %541 = vmatpush.msra.mxu0 0.0
    %542 = vmatpush.msra.mxu0 0.0
    %543 = vmatpush.msra.mxu0 0.0
    %544 = vmatpush.msra.mxu0 0.0
    %v545 = vand.u32 %v99, 4294901760
    %v546 = vsub.f32 %v99, %v545
    %547 = vmatpush.msra.mxu0 %v546
    %v548 = vand.u32 %v97, 4294901760
    %v549 = vsub.f32 %v97, %v548
    %550 = vmatpush.msra.mxu0 %v549
    %v551 = vand.u32 %v95, 4294901760
    %v552 = vsub.f32 %v95, %v551
    %553 = vmatpush.msra.mxu0 %v552
    %v554 = vand.u32 %v93, 4294901760
    %v555 = vsub.f32 %v93, %v554
    %556 = vmatpush.msra.mxu0 %v555
    %v557 = vand.u32 %v91, 4294901760
    %v558 = vsub.f32 %v91, %v557
    %559 = vmatpush.msra.mxu0 %v558
    %v560 = vand.u32 %v89, 4294901760
    %v561 = vsub.f32 %v89, %v560
    %562 = vmatpush.msra.mxu0 %v561
    %v563 = vand.u32 %v102, 4294901760
    %v564 = vsub.f32 %v102, %v563
    %565 = vmatmul.f32.gmra.mxu0 %v564
    %v566 = vpop.f32.mrf.mxu0
    %v567 = vadd.f32 %v521, %v566
    %v568 = vand.u32 %v105, 4294901760
    %v569 = vsub.f32 %v105, %v568
    %570 = vmatmul.f32.gmra.mxu0 %v569
    %v571 = vpop.f32.mrf.mxu0
    %v572 = vadd.f32 %v525, %v571
    %v573 = vand.u32 %v108, 4294901760
    %v574 = vsub.f32 %v108, %v573
    %575 = vmatmul.f32.gmra.mxu0 %v574
    %v576 = vpop.f32.mrf.mxu0
    %v577 = vadd.f32 %v529, %v576
    %v578 = vand.u32 %v111, 4294901760
    %v579 = vsub.f32 %v111, %v578
    %580 = vmatmul.f32.gmra.mxu0 %v579
    %v581 = vpop.f32.mrf.mxu0
    %v582 = vadd.f32 %v533, %v581
    %583 = vdwg.mxu0
    %584 = vmatpush.msra.mxu0 0.0
    %585 = vmatpush.msra.mxu0 0.0
    %586 = vmatpush.msra.mxu0 0.0
    %587 = vmatpush.msra.mxu0 0.0
    %588 = vmatpush.msra.mxu0 0.0
    %589 = vmatpush.msra.mxu0 0.0
    %590 = vmatpush.msra.mxu0 0.0
    %591 = vmatpush.msra.mxu0 0.0
    %592 = vmatpush.msra.mxu0 0.0
    %593 = vmatpush.msra.mxu0 0.0
    %v594 = vand.u32 %v99, 4294901760
    %595 = vmatpush.msra.mxu0 %v594
    %v596 = vand.u32 %v97, 4294901760
    %597 = vmatpush.msra.mxu0 %v596
    %v598 = vand.u32 %v95, 4294901760
    %599 = vmatpush.msra.mxu0 %v598
    %v600 = vand.u32 %v93, 4294901760
    %601 = vmatpush.msra.mxu0 %v600
    %v602 = vand.u32 %v91, 4294901760
    %603 = vmatpush.msra.mxu0 %v602
    %v604 = vand.u32 %v89, 4294901760
    %605 = vmatpush.msra.mxu0 %v604
    %v606 = vand.u32 %v102, 4294901760
    %v607 = vsub.f32 %v102, %v606
    %v608 = vand.u32 %v607, 4294901760
    %609 = vmatmul.f32.gmra.mxu0 %v608
    %v610 = vpop.f32.mrf.mxu0
    %v611 = vadd.f32 %v567, %v610
    %v612 = vand.u32 %v105, 4294901760
    %v613 = vsub.f32 %v105, %v612
    %v614 = vand.u32 %v613, 4294901760
    %615 = vmatmul.f32.gmra.mxu0 %v614
    %v616 = vpop.f32.mrf.mxu0
    %v617 = vadd.f32 %v572, %v616
    %v618 = vand.u32 %v108, 4294901760
    %v619 = vsub.f32 %v108, %v618
    %v620 = vand.u32 %v619, 4294901760
    %621 = vmatmul.f32.gmra.mxu0 %v620
    %v622 = vpop.f32.mrf.mxu0
    %v623 = vadd.f32 %v577, %v622
    %v624 = vand.u32 %v111, 4294901760
    %v625 = vsub.f32 %v111, %v624
    %v626 = vand.u32 %v625, 4294901760
    %627 = vmatmul.f32.gmra.mxu0 %v626
    %v628 = vpop.f32.mrf.mxu0
    %v629 = vadd.f32 %v582, %v628
    %630 = vdwg.mxu0
    %631 = vmatpush.msra.mxu0 0.0
    %632 = vmatpush.msra.mxu0 0.0
    %633 = vmatpush.msra.mxu0 0.0
    %634 = vmatpush.msra.mxu0 0.0
    %635 = vmatpush.msra.mxu0 0.0
    %636 = vmatpush.msra.mxu0 0.0
    %637 = vmatpush.msra.mxu0 0.0
    %638 = vmatpush.msra.mxu0 0.0
    %639 = vmatpush.msra.mxu0 0.0
    %640 = vmatpush.msra.mxu0 0.0
    %v641 = vand.u32 %v99, 4294901760
    %v642 = vsub.f32 %v99, %v641
    %v643 = vand.u32 %v642, 4294901760
    %644 = vmatpush.msra.mxu0 %v643
    %v645 = vand.u32 %v97, 4294901760
    %v646 = vsub.f32 %v97, %v645
    %v647 = vand.u32 %v646, 4294901760
    %648 = vmatpush.msra.mxu0 %v647
    %v649 = vand.u32 %v95, 4294901760
    %v650 = vsub.f32 %v95, %v649
    %v651 = vand.u32 %v650, 4294901760
    %652 = vmatpush.msra.mxu0 %v651
    %v653 = vand.u32 %v93, 4294901760
    %v654 = vsub.f32 %v93, %v653
    %v655 = vand.u32 %v654, 4294901760
    %656 = vmatpush.msra.mxu0 %v655
    %v657 = vand.u32 %v91, 4294901760
    %v658 = vsub.f32 %v91, %v657
    %v659 = vand.u32 %v658, 4294901760
    %660 = vmatpush.msra.mxu0 %v659
    %v661 = vand.u32 %v89, 4294901760
    %v662 = vsub.f32 %v89, %v661
    %v663 = vand.u32 %v662, 4294901760
    %664 = vmatpush.msra.mxu0 %v663
    %v665 = vand.u32 %v102, 4294901760
    %666 = vmatmul.f32.gmra.mxu0 %v665
    %v667 = vpop.f32.mrf.mxu0
    %v668 = vadd.f32 %v611, %v667
    %v669 = vand.u32 %v105, 4294901760
    %670 = vmatmul.f32.gmra.mxu0 %v669
    %v671 = vpop.f32.mrf.mxu0
    %v672 = vadd.f32 %v617, %v671
    %v673 = vand.u32 %v108, 4294901760
    %674 = vmatmul.f32.gmra.mxu0 %v673
    %v675 = vpop.f32.mrf.mxu0
    %v676 = vadd.f32 %v623, %v675
    %v677 = vand.u32 %v111, 4294901760
    %678 = vmatmul.f32.gmra.mxu0 %v677
    %v679 = vpop.f32.mrf.mxu0
    %v680 = vadd.f32 %v629, %v679
    %681 = vdwg.mxu0
    %682 = vmatpush.msra.mxu0 0.0
    %683 = vmatpush.msra.mxu0 0.0
    %684 = vmatpush.msra.mxu0 0.0
    %685 = vmatpush.msra.mxu0 0.0
    %686 = vmatpush.msra.mxu0 0.0
    %687 = vmatpush.msra.mxu0 0.0
    %688 = vmatpush.msra.mxu0 0.0
    %689 = vmatpush.msra.mxu0 0.0
    %690 = vmatpush.msra.mxu0 0.0
    %691 = vmatpush.msra.mxu0 0.0
    %v692 = vand.u32 %v99, 4294901760
    %693 = vmatpush.msra.mxu0 %v692
    %v694 = vand.u32 %v97, 4294901760
    %695 = vmatpush.msra.mxu0 %v694
    %v696 = vand.u32 %v95, 4294901760
    %697 = vmatpush.msra.mxu0 %v696
    %v698 = vand.u32 %v93, 4294901760
    %699 = vmatpush.msra.mxu0 %v698
    %v700 = vand.u32 %v91, 4294901760
    %701 = vmatpush.msra.mxu0 %v700
    %v702 = vand.u32 %v89, 4294901760
    %703 = vmatpush.msra.mxu0 %v702
    %v704 = vand.u32 %v102, 4294901760
    %705 = vmatmul.f32.gmra.mxu0 %v704
    %v706 = vpop.f32.mrf.mxu0
    %v707 = vadd.f32 %v668, %v706
    %v708 = vand.u32 %v105, 4294901760
    %709 = vmatmul.f32.gmra.mxu0 %v708
    %v710 = vpop.f32.mrf.mxu0
    %v711 = vadd.f32 %v672, %v710
    %v712 = vand.u32 %v108, 4294901760
    %713 = vmatmul.f32.gmra.mxu0 %v712
    %v714 = vpop.f32.mrf.mxu0
    %v715 = vadd.f32 %v676, %v714
    %v716 = vand.u32 %v111, 4294901760
    %717 = vmatmul.f32.gmra.mxu0 %v716
    %v718 = vpop.f32.mrf.mxu0
    %v719 = vadd.f32 %v680, %v718
    %720 = vdwg.mxu0
    %v721 = vld [vmem:[%s2] sm:$0xff]
    %v722 = vld [vmem:[%s2 + $0x8] sm:$0xff]
    %v723 = vld [vmem:[%s2 + $0x10] sm:$0xff]
    %v724 = vld [vmem:[%s2 + $0x18] sm:$0xff]
    %v725 = vld [vmem:[%s2 + $0x20] sm:$0xff]
    %v726 = vld [vmem:[%s2 + $0x28] sm:$0xff]
    %v727 = vld [vmem:[%s2 + $0x30] sm:$0xff]
    %v728 = vld [vmem:[%s2 + $0x38] sm:$0xff]
    %v729 = vadd.f32 %v721, %v403
    %v730 = vadd.f32 %v722, %v707
    %v731 = vadd.f32 %v723, %v407
    %v732 = vadd.f32 %v724, %v711
    %v733 = vadd.f32 %v725, %v411
    %v734 = vadd.f32 %v726, %v715
    %v735 = vadd.f32 %v727, %v415
    %v736 = vadd.f32 %v728, %v719
    %737 = vst [vmem:[#allocation5] sm:$0xff] %v729
    %738 = vst [vmem:[#allocation5 + $0x8] sm:$0xff] %v730
    %739 = vst [vmem:[#allocation5 + $0x10] sm:$0xff] %v731
    %740 = vst [vmem:[#allocation5 + $0x18] sm:$0xff] %v732
    %741 = vst [vmem:[#allocation5 + $0x20] sm:$0xff] %v733
    %742 = vst [vmem:[#allocation5 + $0x28] sm:$0xff] %v734
    %743 = vst [vmem:[#allocation5 + $0x30] sm:$0xff] %v735
    %744 = vst [vmem:[#allocation5 + $0x38] sm:$0xff] %v736
    // Predicated region
    $region22: #{_dpe_add.1} parent=1 // pred_check
      _
    $region23: #{_dpe_add.1} parent=1 // pred_check_branch
      %746 = sbr.rel (0) target = $region25
    $region24: #{_dpe_add.1} parent=1 // pred_region
      %748 = vsyncadd [#allocation4], 0
      %s749 = sshll.u32 [#allocation5], 4
      %s750 = int_to_ptr.vmem [resolvable:$true] %s749
      %s751 = sshll.u32 %s4, 4
      %s752 = int_to_ptr.hbm [resolvable:$true] %s751
      %757 = dma.vmem_to_hbm [thread:$0]  %s750, 1024, %s752, [#allocation4], 256, 256, 16
    $region25: #{_dpe_add.1} parent=1 // pred_fallthru
      _
    // Predicated region
    $region26: #{_dpe_add.1} parent=1 // pred_check
      _
    $region27: #{_dpe_add.1} parent=1 // pred_check_branch
      %759 = sbr.rel (0) target = $region29
    $region28: #{_dpe_add.1} parent=1 // pred_region
      %761 = dma.done [#allocation4], 1024
    $region29: #{_dpe_add.1} parent=1 // pred_fallthru
      _
    %762 = vsyncpa [#allocation3], 1
    %763 = vsyncpa [#allocation4], 1

</llo_original>
